<compile_context>
chip_gen: v7x
topology: tpu7x:2x2x1
jax: 0.10.0
libtpu: 0.0.40
codegen_flags: <defaults>
</compile_context>

<pallas_src>
import functools

import jax
import jax.numpy as jnp
from jax.experimental import pallas as pl
from jax.experimental.pallas import tpu as pltpu


def _round_up(x: int, m: int) -> int:
    return (x + m - 1) // m * m


def actor_kernel(s_ref, w1_ref, b1_ref, w2_ref, b2_ref, w3_ref, b3_ref, o_ref,
                 *, max_action: float):
    """One batch tile of the Actor forward. Weights/biases stay VMEM-resident."""
    x = s_ref[...].astype(jnp.bfloat16)                               # (TM, S) bf16
    # fc1 + ReLU   (bf16 MXU operands, f32 accumulate, f32 elementwise)
    h1 = jnp.dot(x, w1_ref[...], preferred_element_type=jnp.float32) + b1_ref[...]
    h1 = jnp.maximum(h1, 0.0)
    # fc2 + ReLU
    h2 = jnp.dot(h1.astype(jnp.bfloat16), w2_ref[...],
                 preferred_element_type=jnp.float32) + b2_ref[...]
    h2 = jnp.maximum(h2, 0.0)
    # fc3 + tanh, scaled by max_action; direct (TM, action_dim) store
    y = jnp.dot(h2.astype(jnp.bfloat16), w3_ref[...],
                preferred_element_type=jnp.float32) + b3_ref[...]
    o_ref[...] = (max_action * jnp.tanh(y)).astype(o_ref.dtype)


def prepare_actor_params(params):
    """One-time (per weight update) prep: cast MXU operands to bf16, biases f32."""
    w1, b1, w2, b2, w3, b3 = params
    return (w1.astype(jnp.bfloat16), b1.astype(jnp.float32),
            w2.astype(jnp.bfloat16), b2.astype(jnp.float32),
            w3.astype(jnp.bfloat16), b3.astype(jnp.float32))


def actor_forward(state, prepared_params, max_action, *, tm_max: int = 2048):
    """Pallas Actor forward. state: (B, state_dim) f32 -> (B, action_dim) f32."""
    w1, b1, w2, b2, w3, b3 = prepared_params
    B, state_dim = state.shape
    action_dim = w3.shape[1]

    # Batch tile: large enough to amortize ~0.35us/grid-step overhead, rounded to
    # 16 (bf16 sublane packing), but always >= 2 grid steps for non-trivial B so
    # the "parallel" batch axis can shard across v7x's 2 TensorCores.
    if B <= 16:
        tm = B                      # single full-batch block, no partial blocks
    else:
        tm = min(tm_max, _round_up(pl.cdiv(_round_up(B, 16), 2), 16))
    grid = (pl.cdiv(B, tm),)

    # Grid-invariant operands: constant index_map keeps them resident in VMEM.
    resident = lambda a: pl.BlockSpec(a.shape, lambda i: (0,) * a.ndim)

    kernel = functools.partial(actor_kernel, max_action=float(max_action))
    return pl.pallas_call(
        kernel,
        out_shape=jax.ShapeDtypeStruct((B, action_dim), jnp.float32),
        grid=grid,
        in_specs=[
            pl.BlockSpec((tm, state_dim), lambda i: (i, 0)),   # state tile
            resident(w1), resident(b1),
            resident(w2), resident(b2),
            resident(w3), resident(b3),
        ],
        out_specs=pl.BlockSpec((tm, action_dim), lambda i: (i, 0)),
        compiler_params=pltpu.CompilerParams(
            dimension_semantics=("parallel",),
            vmem_limit_bytes=32 * 1024 * 1024,
        ),
    )(state, w1, b1, w2, b2, w3, b3)


def init_actor_params(key, state_dim, action_dim, hidden=256):
    """nn.Linear-style init, weights stored as (in_features, out_features), f32."""
    ks = jax.random.split(key, 6)

    def linear(kw, kb, fan_in, fan_out):
        bound = 1.0 / jnp.sqrt(fan_in)
        w = jax.random.uniform(kw, (fan_in, fan_out), jnp.float32, -bound, bound)
        b = jax.random.uniform(kb, (1, fan_out), jnp.float32, -bound, bound)
        return w, b

    w1, b1 = linear(ks[0], ks[1], state_dim, hidden)
    w2, b2 = linear(ks[2], ks[3], hidden, hidden)
    w3, b3 = linear(ks[4], ks[5], hidden, action_dim)
    return (w1, b1, w2, b2, w3, b3)


def actor_forward_ref(state, params, max_action):
    """Plain-JAX f32 reference (matches the PyTorch Actor forward)."""
    w1, b1, w2, b2, w3, b3 = params
    h1 = jnp.maximum(state @ w1 + b1, 0.0)
    h2 = jnp.maximum(h1 @ w2 + b2, 0.0)
    return max_action * jnp.tanh(h2 @ w3 + b3)


def actor_forward_ref_bf16(state, params, max_action):
    """Plain-JAX reference using the same bf16-operand / f32-accumulate recipe."""
    w1, b1, w2, b2, w3, b3 = params
    x = state.astype(jnp.bfloat16)
    h1 = jnp.dot(x, w1.astype(jnp.bfloat16), preferred_element_type=jnp.float32) + b1
    h1 = jnp.maximum(h1, 0.0)
    h2 = jnp.dot(h1.astype(jnp.bfloat16), w2.astype(jnp.bfloat16),
                 preferred_element_type=jnp.float32) + b2
    h2 = jnp.maximum(h2, 0.0)
    y = jnp.dot(h2.astype(jnp.bfloat16), w3.astype(jnp.bfloat16),
                preferred_element_type=jnp.float32) + b3
    return max_action * jnp.tanh(y)


if __name__ == "__main__":
    key = jax.random.PRNGKey(0)
    k_param, k_state = jax.random.split(key)

    batch = 8
    state_dim = 32
    action_dim = 8
    max_action = 2.0

    params = init_actor_params(k_param, state_dim, action_dim, hidden=256)
    prepared = prepare_actor_params(params)          # cached weight casts (per review)
    state = jax.random.normal(k_state, (batch, state_dim), jnp.float32)

    # NOTE: at batch=8 the forward is pure launch/DMA latency (perf review suggests
    # an XLA fallback for B<64 in production); we still run the Pallas kernel here
    # to validate correctness on-device.
    fwd = jax.jit(lambda s: actor_forward(s, prepared, max_action))
    out = jax.block_until_ready(fwd(state))
    assert out.shape == (batch, action_dim)

    # Tight check vs a reference using the same bf16/f32 mixed-precision recipe.
    ref_bf16 = actor_forward_ref_bf16(state, params, max_action)
    assert jnp.allclose(out, ref_bf16, atol=1e-3, rtol=1e-3), "bf16-ref mismatch"

    # Loose sanity check vs the full-f32 reference (bf16 matmul rounding).
    ref_f32 = actor_forward_ref(state, params, max_action)
    assert jnp.allclose(out, ref_f32, atol=5e-2, rtol=5e-2), "f32-ref mismatch"

    print("KERNEL_OK")
</pallas_src>

<mosaic_0001>
module attributes {stable_mosaic.version = 11 : i64} {
  func.func @actor_kernel(%arg0: i32, %arg1: memref<8x32xf32, #tpu.memory_space<vmem>>, %arg2: memref<32x256xbf16, #tpu.memory_space<vmem>>, %arg3: memref<1x256xf32, #tpu.memory_space<vmem>>, %arg4: memref<256x256xbf16, #tpu.memory_space<vmem>>, %arg5: memref<1x256xf32, #tpu.memory_space<vmem>>, %arg6: memref<256x8xbf16, #tpu.memory_space<vmem>>, %arg7: memref<1x8xf32, #tpu.memory_space<vmem>>, %arg8: memref<8x8xf32, #tpu.memory_space<vmem>>) attributes {dimension_semantics = [#tpu.dimension_semantics<parallel>], iteration_bounds = array<i64: 1>, scalar_prefetch = 0 : i64, scratch_operands = 0 : i64, tpu.core_type = #tpu.core_type<tc>, window_params = [{transform_indices = @transform_0, window_bounds = array<i64: 8, 32>}, {pipeline_mode = #tpu.pipeline_mode<synchronous>, transform_indices = @transform_1, window_bounds = array<i64: 32, 256>}, {pipeline_mode = #tpu.pipeline_mode<synchronous>, transform_indices = @transform_2, window_bounds = array<i64: 1, 256>}, {pipeline_mode = #tpu.pipeline_mode<synchronous>, transform_indices = @transform_3, window_bounds = array<i64: 256, 256>}, {pipeline_mode = #tpu.pipeline_mode<synchronous>, transform_indices = @transform_4, window_bounds = array<i64: 1, 256>}, {pipeline_mode = #tpu.pipeline_mode<synchronous>, transform_indices = @transform_5, window_bounds = array<i64: 256, 8>}, {pipeline_mode = #tpu.pipeline_mode<synchronous>, transform_indices = @transform_6, window_bounds = array<i64: 1, 8>}, {transform_indices = @transform_7, window_bounds = array<i64: 8, 8>}]} {
    %c0 = arith.constant 0 : index
    %c0_0 = arith.constant 0 : index
    %0 = vector.load %arg1[%c0, %c0_0] : memref<8x32xf32, #tpu.memory_space<vmem>>, vector<8x32xf32>
    %1 = arith.truncf %0 : vector<8x32xf32> to vector<8x32xbf16>
    %c0_1 = arith.constant 0 : index
    %c0_2 = arith.constant 0 : index
    %2 = vector.load %arg2[%c0_1, %c0_2] : memref<32x256xbf16, #tpu.memory_space<vmem>>, vector<32x256xbf16>
    %cst = arith.constant dense<0.000000e+00> : vector<8x256xf32>
    %3 = tpu.matmul %1, %2, %cst {dimension_numbers = #tpu.dot_dimension_numbers<[1], [0], [0], [1], [0, 0, 1, 1], [], []>} : vector<8x32xbf16>, vector<32x256xbf16>, vector<8x256xf32> -> vector<8x256xf32>
    %c0_3 = arith.constant 0 : index
    %c0_4 = arith.constant 0 : index
    %4 = vector.load %arg3[%c0_3, %c0_4] : memref<1x256xf32, #tpu.memory_space<vmem>>, vector<1x256xf32>
    %5 = vector.broadcast %4 : vector<1x256xf32> to vector<8x256xf32>
    %6 = arith.addf %3, %5 : vector<8x256xf32>
    %cst_5 = arith.constant 0.000000e+00 : f32
    %7 = vector.broadcast %cst_5 : f32 to vector<8x256xf32>
    %8 = arith.maximumf %6, %7 : vector<8x256xf32>
    %9 = arith.truncf %8 : vector<8x256xf32> to vector<8x256xbf16>
    %c0_6 = arith.constant 0 : index
    %c0_7 = arith.constant 0 : index
    %10 = vector.load %arg4[%c0_6, %c0_7] : memref<256x256xbf16, #tpu.memory_space<vmem>>, vector<256x256xbf16>
    %cst_8 = arith.constant dense<0.000000e+00> : vector<8x256xf32>
    %11 = tpu.matmul %9, %10, %cst_8 {dimension_numbers = #tpu.dot_dimension_numbers<[1], [0], [0], [1], [0, 0, 1, 1], [], []>} : vector<8x256xbf16>, vector<256x256xbf16>, vector<8x256xf32> -> vector<8x256xf32>
    %c0_9 = arith.constant 0 : index
    %c0_10 = arith.constant 0 : index
    %12 = vector.load %arg5[%c0_9, %c0_10] : memref<1x256xf32, #tpu.memory_space<vmem>>, vector<1x256xf32>
    %13 = vector.broadcast %12 : vector<1x256xf32> to vector<8x256xf32>
    %14 = arith.addf %11, %13 : vector<8x256xf32>
    %cst_11 = arith.constant 0.000000e+00 : f32
    %15 = vector.broadcast %cst_11 : f32 to vector<8x256xf32>
    %16 = arith.maximumf %14, %15 : vector<8x256xf32>
    %17 = arith.truncf %16 : vector<8x256xf32> to vector<8x256xbf16>
    %c0_12 = arith.constant 0 : index
    %c0_13 = arith.constant 0 : index
    %18 = vector.load %arg6[%c0_12, %c0_13] : memref<256x8xbf16, #tpu.memory_space<vmem>>, vector<256x8xbf16>
    %cst_14 = arith.constant dense<0.000000e+00> : vector<8x8xf32>
    %19 = tpu.matmul %17, %18, %cst_14 {dimension_numbers = #tpu.dot_dimension_numbers<[1], [0], [0], [1], [0, 0, 1, 1], [], []>} : vector<8x256xbf16>, vector<256x8xbf16>, vector<8x8xf32> -> vector<8x8xf32>
    %c0_15 = arith.constant 0 : index
    %c0_16 = arith.constant 0 : index
    %20 = vector.load %arg7[%c0_15, %c0_16] : memref<1x8xf32, #tpu.memory_space<vmem>>, vector<1x8xf32>
    %21 = vector.broadcast %20 : vector<1x8xf32> to vector<8x8xf32>
    %22 = arith.addf %19, %21 : vector<8x8xf32>
    %23 = math.tanh %22 : vector<8x8xf32>
    %cst_17 = arith.constant 2.000000e+00 : f32
    %24 = vector.broadcast %cst_17 : f32 to vector<8x8xf32>
    %25 = arith.mulf %24, %23 : vector<8x8xf32>
    %c0_18 = arith.constant 0 : index
    %c0_19 = arith.constant 0 : index
    %26 = vector.load %arg8[%c0_18, %c0_19] : memref<8x8xf32, #tpu.memory_space<vmem>>, vector<8x8xf32>
    tpu.vector_store %arg8[%c0_18, %c0_19], %25 {strides = array<i32>} : memref<8x8xf32, #tpu.memory_space<vmem>>, vector<8x8xf32>,
    return
  }
  func.func @transform_0(%arg0: i32) -> (i32, i32) {
    %c0_i32 = arith.constant 0 : i32
    %c0_i32_0 = arith.constant 0 : i32
    return %arg0, %c0_i32 : i32, i32
  }
  func.func @transform_1(%arg0: i32) -> (i32, i32) {
    %c0_i32 = arith.constant 0 : i32
    %c0_i32_0 = arith.constant 0 : i32
    %c0_i32_1 = arith.constant 0 : i32
    return %c0_i32, %c0_i32_0 : i32, i32
  }
  func.func @transform_2(%arg0: i32) -> (i32, i32) {
    %c0_i32 = arith.constant 0 : i32
    %c0_i32_0 = arith.constant 0 : i32
    %c0_i32_1 = arith.constant 0 : i32
    return %c0_i32, %c0_i32_0 : i32, i32
  }
  func.func @transform_3(%arg0: i32) -> (i32, i32) {
    %c0_i32 = arith.constant 0 : i32
    %c0_i32_0 = arith.constant 0 : i32
    %c0_i32_1 = arith.constant 0 : i32
    return %c0_i32, %c0_i32_0 : i32, i32
  }
  func.func @transform_4(%arg0: i32) -> (i32, i32) {
    %c0_i32 = arith.constant 0 : i32
    %c0_i32_0 = arith.constant 0 : i32
    %c0_i32_1 = arith.constant 0 : i32
    return %c0_i32, %c0_i32_0 : i32, i32
  }
  func.func @transform_5(%arg0: i32) -> (i32, i32) {
    %c0_i32 = arith.constant 0 : i32
    %c0_i32_0 = arith.constant 0 : i32
    %c0_i32_1 = arith.constant 0 : i32
    return %c0_i32, %c0_i32_0 : i32, i32
  }
  func.func @transform_6(%arg0: i32) -> (i32, i32) {
    %c0_i32 = arith.constant 0 : i32
    %c0_i32_0 = arith.constant 0 : i32
    %c0_i32_1 = arith.constant 0 : i32
    return %c0_i32, %c0_i32_0 : i32, i32
  }
  func.func @transform_7(%arg0: i32) -> (i32, i32) {
    %c0_i32 = arith.constant 0 : i32
    %c0_i32_0 = arith.constant 0 : i32
    return %arg0, %c0_i32 : i32, i32
  }
}

</mosaic_0001>

<llo_original>
// kernel: _lambda_.1
$region0: #{_lambda_.1}
  #allocation0 [shape = 'u32[]', space=smem, size = 0x4, offset = 0x4, fixed_abs, tag = 'smem constant byte address 0x4 - core index']
  #allocation1 [shape = 'u32[144,128]{1,0:T(1,128)}', space=vmem, size = 0x12000, scoped, tag = 'internal scratch']
  %s0 = inlined_call_operand.vmem [shape: f32[8,32], index: 0, kind: input, shape index: {}]
  %s1 = inlined_call_operand.vmem [shape: bf16[32,256], index: 1, kind: input, shape index: {}]
  %s2 = inlined_call_operand.vmem [shape: f32[1,256], index: 2, kind: input, shape index: {}]
  %s3 = inlined_call_operand.vmem [shape: bf16[256,256], index: 3, kind: input, shape index: {}]
  %s4 = inlined_call_operand.vmem [shape: f32[1,256], index: 4, kind: input, shape index: {}]
  %s5 = inlined_call_operand.vmem [shape: bf16[256,8], index: 5, kind: input, shape index: {}]
  %s6 = inlined_call_operand.vmem [shape: f32[1,8], index: 6, kind: input, shape index: {}]
  %s7 = inlined_call_operand.hbm [shape: f32[8,8], index: 7, kind: output, shape index: {}]
  %s8 = sld [smem:[#allocation0]]
  $region38: #{_lambda_.1} parent=0
    _
  %s10 = ssub.s32 1, %s8
  %s11 = scalar_select 0, %s10, %s8
  $region1: #{_lambda_.1} parent=0
    #allocation2 [shape = 'u8[4096]{0}', space=vmem, size = 0x1000, scoped, tag = 'output window, operand 0, single buffered']
    #allocation3 [shape = 's32[1]{0}', space=sflag, size = 0x4, scoped, tag = 'scoped memory for _lambda_.1']
    %12 = vsyncpa [#allocation3], 0
    // Predicated region
    $region2: #{_lambda_.1} parent=1 // pred_check
      _
    $region3: #{_lambda_.1} parent=1 // pred_check_branch
      %14 = sbr.rel (0) target = $region5
    $region4: #{_lambda_.1} parent=1 // pred_region
      _
    $region5: #{_lambda_.1} parent=1 // pred_fallthru
      _
    // Predicated region
    $region6: #{_lambda_.1} parent=1 // pred_check
      _
    $region7: #{_lambda_.1} parent=1 // pred_check_branch
      %16 = sbr.rel (0) target = $region9
    $region8: #{_lambda_.1} parent=1 // pred_region
      _
    $region9: #{_lambda_.1} parent=1 // pred_fallthru
      _
    // Predicated region
    $region10: #{_lambda_.1} parent=1 // pred_check
      _
    $region11: #{_lambda_.1} parent=1 // pred_check_branch
      %18 = sbr.rel (0) target = $region13
    $region12: #{_lambda_.1} parent=1 // pred_region
      _
    $region13: #{_lambda_.1} parent=1 // pred_fallthru
      _
    // Predicated region
    $region14: #{_lambda_.1} parent=1 // pred_check
      _
    $region15: #{_lambda_.1} parent=1 // pred_check_branch
      %20 = sbr.rel (0) target = $region17
    $region16: #{_lambda_.1} parent=1 // pred_region
      _
    $region17: #{_lambda_.1} parent=1 // pred_fallthru
      _
    // Predicated region
    $region18: #{_lambda_.1} parent=1 // pred_check
      _
    $region19: #{_lambda_.1} parent=1 // pred_check_branch
      %22 = sbr.rel (0) target = $region21
    $region20: #{_lambda_.1} parent=1 // pred_region
      _
    $region21: #{_lambda_.1} parent=1 // pred_fallthru
      _
    // Predicated region
    $region22: #{_lambda_.1} parent=1 // pred_check
      _
    $region23: #{_lambda_.1} parent=1 // pred_check_branch
      %24 = sbr.rel (0) target = $region25
    $region24: #{_lambda_.1} parent=1 // pred_region
      _
    $region25: #{_lambda_.1} parent=1 // pred_fallthru
      _
    // Predicated region
    $region26: #{_lambda_.1} parent=1 // pred_check
      _
    $region27: #{_lambda_.1} parent=1 // pred_check_branch
      %26 = sbr.rel (0) target = $region29
    $region28: #{_lambda_.1} parent=1 // pred_region
      _
    $region29: #{_lambda_.1} parent=1 // pred_fallthru
      _
    %v28 = vld [vmem:[%s0] sm:$0xff]
    %v29 = vpack.c.bf16 %v28, %v28
    %v30 = vld [vmem:[%s1] sm:$0xff]
    %v31 = vld [vmem:[%s1 + $0x8] sm:$0xff]
    %v32 = vld [vmem:[%s1 + $0x10] sm:$0xff]
    %v33 = vld [vmem:[%s1 + $0x18] sm:$0xff]
    %v34 = vld [vmem:[%s2] sm:$0x3]
    %v36 = vlaneseq
    %v37 = vshrl.u32 %v36, 7
    %v38 = vsub.s32 0, %v37
    %v39 = vrot.slane %v34, %v38
    %v40 = vlaneseq
    %v41 = vshrl.u32 %v40, 7
    %v42 = vsub.s32 1, %v41
    %v43 = vrot.slane %v34, %v42
    %v50 = vunpack.c.l.b16 %v30
    %v51 = vunpack.c.h.b16 %v30
    %v52 = vunpack.c.l.b16 %v31
    %v53 = vunpack.c.h.b16 %v31
    %v54 = vunpack.c.l.b16 %v32
    %v55 = vunpack.c.h.b16 %v32
    %v56 = vunpack.c.l.b16 %v33
    %v57 = vunpack.c.h.b16 %v33
    %v58 = vpack.c.b16 %v52, %v50
    %v59 = vpack.c.b16 %v53, %v51
    %v60 = vpack.c.b16 %v56, %v54
    %v61 = vpack.c.b16 %v57, %v55
    %vm66 = vcmask 261120
    %v68 = vsel %vm66, %v29, 0
    %70 = vmatprep.subr.bf16.mxu0 %v59
    %71 = vmatpush1.bf16.msra.mxu0 %v58
    %72 = vmatprep.subr.bf16.mxu0 %v61
    %73 = vmatpush1.bf16.msra.mxu0 %v60
    %74 = vmatprep.subr.bf16.mxu0 0
    %75 = vmatpush1.bf16.msra.mxu0 0
    %76 = vmatprep.subr.bf16.mxu0 0
    %77 = vmatpush1.bf16.msra.mxu0 0
    %78 = vmatprep.subr.bf16.mxu0 0
    %79 = vmatpush1.bf16.msra.mxu0 0
    %80 = vmatprep.subr.bf16.mxu0 0
    %81 = vmatpush1.bf16.msra.mxu0 0
    %82 = vmatprep.subr.bf16.mxu0 0
    %83 = vmatpush1.bf16.msra.mxu0 0
    %84 = vmatprep.subr.bf16.mxu0 0
    %85 = vmatpush1.bf16.msra.mxu0 0
    %86 = vmatprep.subr.bf16.mxu0 0
    %87 = vmatpush1.bf16.msra.mxu0 0
    %88 = vmatprep.subr.bf16.mxu0 0
    %89 = vmatpush1.bf16.msra.mxu0 0
    %90 = vmatprep.subr.bf16.mxu0 0
    %91 = vmatpush1.bf16.msra.mxu0 0
    %92 = vmatprep.subr.bf16.mxu0 0
    %93 = vmatpush1.bf16.msra.mxu0 0
    %94 = vmatprep.subr.bf16.mxu0 0
    %95 = vmatpush1.bf16.msra.mxu0 0
    %96 = vmatprep.subr.bf16.mxu0 0
    %97 = vmatpush1.bf16.msra.mxu0 0
    %98 = vmatprep.subr.bf16.mxu0 0
    %99 = vmatpush1.bf16.msra.mxu0 0
    %100 = vmatprep.subr.bf16.mxu0 0
    %101 = vmatpush1.bf16.msra.mxu0 0
    %102 = vmatprep.mubr.bf16.mxu0 0
    %103 = vmatmul.mubr.bf16.gmra.mrb[0].mxu0 %v68
    %v104 = vpop.f32.mrb[0].mxu0
    %v105 = vadd.f32 %v39, %v104
    %v106 = vpop.f32.mrb[0].mxu0
    %v107 = vadd.f32 %v43, %v106
    %v108 = vpop.f32.mrb[0].mxu0
    %v109 = vpop.f32.mrb[0].mxu0
    %110 = vdwg.mxu0
    %v111 = vmax.f32 %v105, 0.0
    %v112 = vmax.f32 %v107, 0.0
    %v113 = vpack.c.bf16 %v111, %v111
    %v114 = vpack.c.bf16 %v112, %v112
    %v115 = vld [vmem:[%s3] sm:$0xff]
    %v116 = vld [vmem:[%s3 + $0x8] sm:$0xff]
    %v117 = vld [vmem:[%s3 + $0x10] sm:$0xff]
    %v118 = vld [vmem:[%s3 + $0x18] sm:$0xff]
    %v119 = vld [vmem:[%s3 + $0x20] sm:$0xff]
    %v120 = vld [vmem:[%s3 + $0x28] sm:$0xff]
    %v121 = vld [vmem:[%s3 + $0x30] sm:$0xff]
    %v122 = vld [vmem:[%s3 + $0x38] sm:$0xff]
    %v123 = vld [vmem:[%s3 + $0x40] sm:$0xff]
    %v124 = vld [vmem:[%s3 + $0x48] sm:$0xff]
    %v125 = vld [vmem:[%s3 + $0x50] sm:$0xff]
    %v126 = vld [vmem:[%s3 + $0x58] sm:$0xff]
    %v127 = vld [vmem:[%s3 + $0x60] sm:$0xff]
    %v128 = vld [vmem:[%s3 + $0x68] sm:$0xff]
    %v129 = vld [vmem:[%s3 + $0x70] sm:$0xff]
    %v130 = vld [vmem:[%s3 + $0x78] sm:$0xff]
    %v131 = vld [vmem:[%s3 + $0x80] sm:$0xff]
    %v132 = vld [vmem:[%s3 + $0x88] sm:$0xff]
    %v133 = vld [vmem:[%s3 + $0x90] sm:$0xff]
    %v134 = vld [vmem:[%s3 + $0x98] sm:$0xff]
    %v135 = vld [vmem:[%s3 + $0xa0] sm:$0xff]
    %v136 = vld [vmem:[%s3 + $0xa8] sm:$0xff]
    %v137 = vld [vmem:[%s3 + $0xb0] sm:$0xff]
    %v138 = vld [vmem:[%s3 + $0xb8] sm:$0xff]
    %v139 = vld [vmem:[%s3 + $0xc0] sm:$0xff]
    %v140 = vld [vmem:[%s3 + $0xc8] sm:$0xff]
    %v141 = vld [vmem:[%s3 + $0xd0] sm:$0xff]
    %v142 = vld [vmem:[%s3 + $0xd8] sm:$0xff]
    %v143 = vld [vmem:[%s3 + $0xe0] sm:$0xff]
    %v144 = vld [vmem:[%s3 + $0xe8] sm:$0xff]
    %v145 = vld [vmem:[%s3 + $0xf0] sm:$0xff]
    %v146 = vld [vmem:[%s3 + $0xf8] sm:$0xff]
    %v147 = vld [vmem:[%s4] sm:$0x3]
    %v149 = vlaneseq
    %v150 = vshrl.u32 %v149, 7
    %v151 = vsub.s32 0, %v150
    %v152 = vrot.slane %v147, %v151
    %v153 = vlaneseq
    %v154 = vshrl.u32 %v153, 7
    %v155 = vsub.s32 1, %v154
    %v156 = vrot.slane %v147, %v155
    %v191 = vunpack.c.l.b16 %v115
    %v192 = vunpack.c.h.b16 %v115
    %v193 = vunpack.c.l.b16 %v116
    %v194 = vunpack.c.h.b16 %v116
    %v195 = vunpack.c.l.b16 %v117
    %v196 = vunpack.c.h.b16 %v117
    %v197 = vunpack.c.l.b16 %v118
    %v198 = vunpack.c.h.b16 %v118
    %v199 = vunpack.c.l.b16 %v119
    %v200 = vunpack.c.h.b16 %v119
    %v201 = vunpack.c.l.b16 %v120
    %v202 = vunpack.c.h.b16 %v120
    %v203 = vunpack.c.l.b16 %v121
    %v204 = vunpack.c.h.b16 %v121
    %v205 = vunpack.c.l.b16 %v122
    %v206 = vunpack.c.h.b16 %v122
    %v207 = vunpack.c.l.b16 %v123
    %v208 = vunpack.c.h.b16 %v123
    %v209 = vunpack.c.l.b16 %v124
    %v210 = vunpack.c.h.b16 %v124
    %v211 = vunpack.c.l.b16 %v125
    %v212 = vunpack.c.h.b16 %v125
    %v213 = vunpack.c.l.b16 %v126
    %v214 = vunpack.c.h.b16 %v126
    %v215 = vunpack.c.l.b16 %v127
    %v216 = vunpack.c.h.b16 %v127
    %v217 = vunpack.c.l.b16 %v128
    %v218 = vunpack.c.h.b16 %v128
    %v219 = vunpack.c.l.b16 %v129
    %v220 = vunpack.c.h.b16 %v129
    %v221 = vunpack.c.l.b16 %v130
    %v222 = vunpack.c.h.b16 %v130
    %v223 = vunpack.c.l.b16 %v131
    %v224 = vunpack.c.h.b16 %v131
    %v225 = vunpack.c.l.b16 %v132
    %v226 = vunpack.c.h.b16 %v132
    %v227 = vunpack.c.l.b16 %v133
    %v228 = vunpack.c.h.b16 %v133
    %v229 = vunpack.c.l.b16 %v134
    %v230 = vunpack.c.h.b16 %v134
    %v231 = vunpack.c.l.b16 %v135
    %v232 = vunpack.c.h.b16 %v135
    %v233 = vunpack.c.l.b16 %v136
    %v234 = vunpack.c.h.b16 %v136
    %v235 = vunpack.c.l.b16 %v137
    %v236 = vunpack.c.h.b16 %v137
    %v237 = vunpack.c.l.b16 %v138
    %v238 = vunpack.c.h.b16 %v138
    %v239 = vunpack.c.l.b16 %v139
    %v240 = vunpack.c.h.b16 %v139
    %v241 = vunpack.c.l.b16 %v140
    %v242 = vunpack.c.h.b16 %v140
    %v243 = vunpack.c.l.b16 %v141
    %v244 = vunpack.c.h.b16 %v141
    %v245 = vunpack.c.l.b16 %v142
    %v246 = vunpack.c.h.b16 %v142
    %v247 = vunpack.c.l.b16 %v143
    %v248 = vunpack.c.h.b16 %v143
    %v249 = vunpack.c.l.b16 %v144
    %v250 = vunpack.c.h.b16 %v144
    %v251 = vunpack.c.l.b16 %v145
    %v252 = vunpack.c.h.b16 %v145
    %v253 = vunpack.c.l.b16 %v146
    %v254 = vunpack.c.h.b16 %v146
    %v255 = vpack.c.b16 %v193, %v191
    %v256 = vpack.c.b16 %v194, %v192
    %v257 = vpack.c.b16 %v197, %v195
    %v258 = vpack.c.b16 %v198, %v196
    %v259 = vpack.c.b16 %v201, %v199
    %v260 = vpack.c.b16 %v202, %v200
    %v261 = vpack.c.b16 %v205, %v203
    %v262 = vpack.c.b16 %v206, %v204
    %v263 = vpack.c.b16 %v209, %v207
    %v264 = vpack.c.b16 %v210, %v208
    %v265 = vpack.c.b16 %v213, %v211
    %v266 = vpack.c.b16 %v214, %v212
    %v267 = vpack.c.b16 %v217, %v215
    %v268 = vpack.c.b16 %v218, %v216
    %v269 = vpack.c.b16 %v221, %v219
    %v270 = vpack.c.b16 %v222, %v220
    %v271 = vpack.c.b16 %v225, %v223
    %v272 = vpack.c.b16 %v226, %v224
    %v273 = vpack.c.b16 %v229, %v227
    %v274 = vpack.c.b16 %v230, %v228
    %v275 = vpack.c.b16 %v233, %v231
    %v276 = vpack.c.b16 %v234, %v232
    %v277 = vpack.c.b16 %v237, %v235
    %v278 = vpack.c.b16 %v238, %v236
    %v279 = vpack.c.b16 %v241, %v239
    %v280 = vpack.c.b16 %v242, %v240
    %v281 = vpack.c.b16 %v245, %v243
    %v282 = vpack.c.b16 %v246, %v244
    %v283 = vpack.c.b16 %v249, %v247
    %v284 = vpack.c.b16 %v250, %v248
    %v285 = vpack.c.b16 %v253, %v251
    %v286 = vpack.c.b16 %v254, %v252
    %319 = vmatprep.subr.bf16.mxu0 %v256
    %320 = vmatpush1.bf16.msra.mxu0 %v255
    %321 = vmatprep.subr.bf16.mxu0 %v258
    %322 = vmatpush1.bf16.msra.mxu0 %v257
    %323 = vmatprep.subr.bf16.mxu0 %v260
    %324 = vmatpush1.bf16.msra.mxu0 %v259
    %325 = vmatprep.subr.bf16.mxu0 %v262
    %326 = vmatpush1.bf16.msra.mxu0 %v261
    %327 = vmatprep.subr.bf16.mxu0 %v264
    %328 = vmatpush1.bf16.msra.mxu0 %v263
    %329 = vmatprep.subr.bf16.mxu0 %v266
    %330 = vmatpush1.bf16.msra.mxu0 %v265
    %331 = vmatprep.subr.bf16.mxu0 %v268
    %332 = vmatpush1.bf16.msra.mxu0 %v267
    %333 = vmatprep.subr.bf16.mxu0 %v270
    %334 = vmatpush1.bf16.msra.mxu0 %v269
    %335 = vmatprep.subr.bf16.mxu0 %v272
    %336 = vmatpush1.bf16.msra.mxu0 %v271
    %337 = vmatprep.subr.bf16.mxu0 %v274
    %338 = vmatpush1.bf16.msra.mxu0 %v273
    %339 = vmatprep.subr.bf16.mxu0 %v276
    %340 = vmatpush1.bf16.msra.mxu0 %v275
    %341 = vmatprep.subr.bf16.mxu0 %v278
    %342 = vmatpush1.bf16.msra.mxu0 %v277
    %343 = vmatprep.subr.bf16.mxu0 %v280
    %344 = vmatpush1.bf16.msra.mxu0 %v279
    %345 = vmatprep.subr.bf16.mxu0 %v282
    %346 = vmatpush1.bf16.msra.mxu0 %v281
    %347 = vmatprep.subr.bf16.mxu0 %v284
    %348 = vmatpush1.bf16.msra.mxu0 %v283
    %349 = vmatprep.subr.bf16.mxu0 %v286
    %350 = vmatpush1.bf16.msra.mxu0 %v285
    %351 = vmatprep.mubr.bf16.mxu0 %v114
    %352 = vmatmul.mubr.bf16.gmra.mrb[0].mxu0 %v113
    %v353 = vpop.f32.mrb[0].mxu0
    %v354 = vadd.f32 %v152, %v353
    %v355 = vpop.f32.mrb[0].mxu0
    %v356 = vadd.f32 %v156, %v355
    %v357 = vpop.f32.mrb[0].mxu0
    %v358 = vpop.f32.mrb[0].mxu0
    %359 = vdwg.mxu0
    %v360 = vmax.f32 %v354, 0.0
    %v361 = vmax.f32 %v356, 0.0
    %v362 = vpack.c.bf16 %v360, %v360
    %v363 = vpack.c.bf16 %v361, %v361
    %v364 = vld [vmem:[%s5] sm:$0xf]
    %v365 = vld [vmem:[%s5 + $0x4] sm:$0xf]
    %v366 = vld [vmem:[%s5 + $0x8] sm:$0xf]
    %v367 = vld [vmem:[%s5 + $0xc] sm:$0xf]
    %v368 = vld [vmem:[%s5 + $0x10] sm:$0xf]
    %v369 = vld [vmem:[%s5 + $0x14] sm:$0xf]
    %v370 = vld [vmem:[%s5 + $0x18] sm:$0xf]
    %v371 = vld [vmem:[%s5 + $0x1c] sm:$0xf]
    %v372 = vld [vmem:[%s5 + $0x20] sm:$0xf]
    %v373 = vld [vmem:[%s5 + $0x24] sm:$0xf]
    %v374 = vld [vmem:[%s5 + $0x28] sm:$0xf]
    %v375 = vld [vmem:[%s5 + $0x2c] sm:$0xf]
    %v376 = vld [vmem:[%s5 + $0x30] sm:$0xf]
    %v377 = vld [vmem:[%s5 + $0x34] sm:$0xf]
    %v378 = vld [vmem:[%s5 + $0x38] sm:$0xf]
    %v379 = vld [vmem:[%s5 + $0x3c] sm:$0xf]
    %v380 = vld [vmem:[%s5 + $0x40] sm:$0xf]
    %v381 = vld [vmem:[%s5 + $0x44] sm:$0xf]
    %v382 = vld [vmem:[%s5 + $0x48] sm:$0xf]
    %v383 = vld [vmem:[%s5 + $0x4c] sm:$0xf]
    %v384 = vld [vmem:[%s5 + $0x50] sm:$0xf]
    %v385 = vld [vmem:[%s5 + $0x54] sm:$0xf]
    %v386 = vld [vmem:[%s5 + $0x58] sm:$0xf]
    %v387 = vld [vmem:[%s5 + $0x5c] sm:$0xf]
    %v388 = vld [vmem:[%s5 + $0x60] sm:$0xf]
    %v389 = vld [vmem:[%s5 + $0x64] sm:$0xf]
    %v390 = vld [vmem:[%s5 + $0x68] sm:$0xf]
    %v391 = vld [vmem:[%s5 + $0x6c] sm:$0xf]
    %v392 = vld [vmem:[%s5 + $0x70] sm:$0xf]
    %v393 = vld [vmem:[%s5 + $0x74] sm:$0xf]
    %v394 = vld [vmem:[%s5 + $0x78] sm:$0xf]
    %v395 = vld [vmem:[%s5 + $0x7c] sm:$0xf]
    %v396 = vld [vmem:[%s6] sm:$0x1]
    %v398 = vlaneseq
    %v399 = vshrl.u32 %v398, 7
    %v400 = vsub.s32 0, %v399
    %v401 = vrot.slane %v396, %v400
    %v435 = vunpack.c.l.b16 %v364
    %v436 = vunpack.c.l.b16 %v365
    %v437 = vunpack.c.l.b16 %v366
    %v438 = vunpack.c.l.b16 %v367
    %v439 = vunpack.c.l.b16 %v368
    %v440 = vunpack.c.l.b16 %v369
    %v441 = vunpack.c.l.b16 %v370
    %v442 = vunpack.c.l.b16 %v371
    %v443 = vunpack.c.l.b16 %v372
    %v444 = vunpack.c.l.b16 %v373
    %v445 = vunpack.c.l.b16 %v374
    %v446 = vunpack.c.l.b16 %v375
    %v447 = vunpack.c.l.b16 %v376
    %v448 = vunpack.c.l.b16 %v377
    %v449 = vunpack.c.l.b16 %v378
    %v450 = vunpack.c.l.b16 %v379
    %v451 = vunpack.c.l.b16 %v380
    %v452 = vunpack.c.l.b16 %v381
    %v453 = vunpack.c.l.b16 %v382
    %v454 = vunpack.c.l.b16 %v383
    %v455 = vunpack.c.l.b16 %v384
    %v456 = vunpack.c.l.b16 %v385
    %v457 = vunpack.c.l.b16 %v386
    %v458 = vunpack.c.l.b16 %v387
    %v459 = vunpack.c.l.b16 %v388
    %v460 = vunpack.c.l.b16 %v389
    %v461 = vunpack.c.l.b16 %v390
    %v462 = vunpack.c.l.b16 %v391
    %v463 = vunpack.c.l.b16 %v392
    %v464 = vunpack.c.l.b16 %v393
    %v465 = vunpack.c.l.b16 %v394
    %v466 = vunpack.c.l.b16 %v395
    %v467 = vpack.c.b16 %v436, %v435
    %v468 = vpack.c.b16 %v438, %v437
    %v469 = vpack.c.b16 %v440, %v439
    %v470 = vpack.c.b16 %v442, %v441
    %v471 = vpack.c.b16 %v444, %v443
    %v472 = vpack.c.b16 %v446, %v445
    %v473 = vpack.c.b16 %v448, %v447
    %v474 = vpack.c.b16 %v450, %v449
    %v475 = vpack.c.b16 %v452, %v451
    %v476 = vpack.c.b16 %v454, %v453
    %v477 = vpack.c.b16 %v456, %v455
    %v478 = vpack.c.b16 %v458, %v457
    %v479 = vpack.c.b16 %v460, %v459
    %v480 = vpack.c.b16 %v462, %v461
    %v481 = vpack.c.b16 %v464, %v463
    %v482 = vpack.c.b16 %v466, %v465
    %499 = vmatprep.subr.bf16.mxu0 0
    %500 = vmatpush1.bf16.msra.mxu0 %v467
    %501 = vmatprep.subr.bf16.mxu0 0
    %502 = vmatpush1.bf16.msra.mxu0 %v468
    %503 = vmatprep.subr.bf16.mxu0 0
    %504 = vmatpush1.bf16.msra.mxu0 %v469
    %505 = vmatprep.subr.bf16.mxu0 0
    %506 = vmatpush1.bf16.msra.mxu0 %v470
    %507 = vmatprep.subr.bf16.mxu0 0
    %508 = vmatpush1.bf16.msra.mxu0 %v471
    %509 = vmatprep.subr.bf16.mxu0 0
    %510 = vmatpush1.bf16.msra.mxu0 %v472
    %511 = vmatprep.subr.bf16.mxu0 0
    %512 = vmatpush1.bf16.msra.mxu0 %v473
    %513 = vmatprep.subr.bf16.mxu0 0
    %514 = vmatpush1.bf16.msra.mxu0 %v474
    %515 = vmatprep.subr.bf16.mxu0 0
    %516 = vmatpush1.bf16.msra.mxu0 %v475
    %517 = vmatprep.subr.bf16.mxu0 0
    %518 = vmatpush1.bf16.msra.mxu0 %v476
    %519 = vmatprep.subr.bf16.mxu0 0
    %520 = vmatpush1.bf16.msra.mxu0 %v477
    %521 = vmatprep.subr.bf16.mxu0 0
    %522 = vmatpush1.bf16.msra.mxu0 %v478
    %523 = vmatprep.subr.bf16.mxu0 0
    %524 = vmatpush1.bf16.msra.mxu0 %v479
    %525 = vmatprep.subr.bf16.mxu0 0
    %526 = vmatpush1.bf16.msra.mxu0 %v480
    %527 = vmatprep.subr.bf16.mxu0 0
    %528 = vmatpush1.bf16.msra.mxu0 %v481
    %529 = vmatprep.subr.bf16.mxu0 0
    %530 = vmatpush1.bf16.msra.mxu0 %v482
    %531 = vmatprep.mubr.bf16.mxu0 %v363
    %532 = vmatmul.mubr.bf16.gmra.mrb[0].mxu0 %v362
    %v533 = vpop.f32.mrb[0].mxu0
    %v534 = vadd.f32 %v401, %v533
    %v535 = vpop.f32.mrb[0].mxu0
    %v536 = vpop.f32.mrb[0].mxu0
    %v537 = vpop.f32.mrb[0].mxu0
    %538 = vdwg.mxu0
    %v539 = vtanh.pop %v534
    %v540 = vmul.f32 %v539, 2.0
    %vm541 = vcmask 64512
    %542 = vst.msk [vmem:[#allocation2] sm:$0xff] %vm541, %v540
    // Predicated region
    $region30: #{_lambda_.1} parent=1 // pred_check
      _
    $region31: #{_lambda_.1} parent=1 // pred_check_branch
      %544 = sbr.rel (0) target = $region33
    $region32: #{_lambda_.1} parent=1 // pred_region
      %s546 = ssub.s32 128, 128
      %547 = vsyncadd [#allocation3], %s546
      %s549 = sshll.u32 [#allocation2], 4
      %s550 = int_to_ptr.vmem [resolvable:$true] %s549
      %552 = dma.vmem_to_hbm [thread:$0]  %s550, 128, %s7, [#allocation3]
    $region33: #{_lambda_.1} parent=1 // pred_fallthru
      _
    // Predicated region
    $region34: #{_lambda_.1} parent=1 // pred_check
      _
    $region35: #{_lambda_.1} parent=1 // pred_check_branch
      %554 = sbr.rel (0) target = $region37
    $region36: #{_lambda_.1} parent=1 // pred_region
      %555 = dma.done [#allocation3], 128
    $region37: #{_lambda_.1} parent=1 // pred_fallthru
      _
    %556 = vsyncpa [#allocation3], 1

</llo_original>
